<compile_context>
chip_gen: v5e
topology: v5e:2x2
jax: 0.10.0
libtpu: 0.0.40
codegen_flags: <defaults>
</compile_context>

<pallas_src>
import functools

import jax
import jax.numpy as jnp
from jax.experimental import pallas as pl
from jax.experimental.pallas import tpu as pltpu


_F_IN = 13   # input / output feature dim
_F_HID = 5   # intermediate dim

# Approximate VMEM bytes per batch column for the transposed kernel:
#   input  (13, tb) -> 16 sublanes * 4 B, double-buffered  = 128 B
#   output (13, tb) -> 16 sublanes * 4 B, double-buffered  = 128 B
#   h/z/d (<= 8 sublanes) + y (16 sublanes) f32 temps      ~ 160 B
_BYTES_PER_COL_T = 448


def _vmem_capacity_bytes():
    try:
        return int(pltpu.get_tpu_info().vmem_capacity_bytes)
    except Exception:
        return 64 << 20          # conservative: v7x per-TensorCore VMEM


def _round_down_128(n):
    return max(128, (n // 128) * 128)


def _pick_tile_t(batch, tile_b):
    """Lane (batch) tile width for the transposed (features, batch) kernel."""
    if tile_b is None:
        budget = min(int(0.4 * _vmem_capacity_bytes()), 48 << 20)
        tile_b = budget // _BYTES_PER_COL_T
    tb = min(_round_down_128(tile_b), 65536)      # 64K cap: fits v7x 64 MiB VMEM
    if batch < 256:
        return batch                              # single full-extent block
    # Guarantee >= 2 grid steps so both v7x TensorCores stream.
    return min(tb, _round_down_128((batch + 1) // 2))


# ----------------------------------------------------------------------------
# Primary kernel: (features, batch) layout, batch on lanes.
# ----------------------------------------------------------------------------
def _autoencoder_kernel_t(x_ref,
                          w1_ref, b1_ref, w2_ref, b2_ref,
                          w3_ref, b3_ref, w4_ref, b4_ref,
                          o_ref):
    """Fused encoder+decoder forward for one lane-dense (13, TB) tile.

    Weights in PyTorch (out, in) layout, biases as (out, 1) columns, so the
    kernel computes y = relu(W @ X + b) directly.
    """
    x = x_ref[...]
    h = jnp.maximum(
        jnp.dot(w1_ref[...], x, preferred_element_type=jnp.float32) + b1_ref[...], 0.0)
    z = jnp.maximum(
        jnp.dot(w2_ref[...], h, preferred_element_type=jnp.float32) + b2_ref[...], 0.0)
    d = jnp.maximum(
        jnp.dot(w3_ref[...], z, preferred_element_type=jnp.float32) + b3_ref[...], 0.0)
    y = jnp.maximum(
        jnp.dot(w4_ref[...], d, preferred_element_type=jnp.float32) + b4_ref[...], 0.0)
    o_ref[...] = y.astype(o_ref.dtype)


@functools.partial(jax.jit, static_argnames=("tile_b",))
def autoencoder_forward_t(x_t, params, *, tile_b=None):
    """Preferred entry point: x_t is (13, B) features-major. Returns (13, B)."""
    f, batch = x_t.shape
    assert f == _F_IN
    tb = _pick_tile_t(batch, tile_b)
    latent = params["w2"].shape[0]

    vmem_limit = int(min(max(32 << 20, tb * _BYTES_PER_COL_T + (4 << 20)), 100 << 20))
    flops = 2 * batch * (13 * 5 + 5 * latent + latent * 5 + 5 * 13)
    bytes_accessed = 2 * 13 * batch * 4

    w1, b1 = params["w1"], params["b1"]
    w2, b2 = params["w2"], params["b2"]
    w3, b3 = params["w3"], params["b3"]
    w4, b4 = params["w4"], params["b4"]

    rep = lambda a: pl.BlockSpec(a.shape, lambda i: (0, 0))   # resident tiny params

    return pl.pallas_call(
        _autoencoder_kernel_t,
        out_shape=jax.ShapeDtypeStruct((13, batch), jnp.float32),
        grid=(pl.cdiv(batch, tb),),
        in_specs=[
            pl.BlockSpec((13, tb), lambda i: (0, i)),          # lane-dense x tile
            rep(w1), rep(b1), rep(w2), rep(b2),
            rep(w3), rep(b3), rep(w4), rep(b4),
        ],
        out_specs=pl.BlockSpec((13, tb), lambda i: (0, i)),
        compiler_params=pltpu.CompilerParams(
            dimension_semantics=("parallel",),
            vmem_limit_bytes=vmem_limit),
        cost_estimate=pl.CostEstimate(
            flops=flops, transcendentals=0, bytes_accessed=bytes_accessed),
    )(x_t, w1, b1, w2, b2, w3, b3, w4, b4)


# ----------------------------------------------------------------------------
# Compatibility kernel: PyTorch (B, 13) API without any full-array transpose.
# Weights are pre-transposed host-side (<= 65 floats) to (in, out), biases to
# (1, out), so the kernel computes y = relu(x @ Wt + b) in row layout.
# ----------------------------------------------------------------------------
def _autoencoder_kernel_rows(x_ref,
                             w1t_ref, b1_ref, w2t_ref, b2_ref,
                             w3t_ref, b3_ref, w4t_ref, b4_ref,
                             o_ref):
    x = x_ref[...]                                              # (TB, 13)
    h = jnp.maximum(
        jnp.dot(x, w1t_ref[...], preferred_element_type=jnp.float32) + b1_ref[...], 0.0)
    z = jnp.maximum(
        jnp.dot(h, w2t_ref[...], preferred_element_type=jnp.float32) + b2_ref[...], 0.0)
    d = jnp.maximum(
        jnp.dot(z, w3t_ref[...], preferred_element_type=jnp.float32) + b3_ref[...], 0.0)
    y = jnp.maximum(
        jnp.dot(d, w4t_ref[...], preferred_element_type=jnp.float32) + b4_ref[...], 0.0)
    o_ref[...] = y.astype(o_ref.dtype)


@functools.partial(jax.jit, static_argnames=("tile_b",))
def autoencoder_forward(x, params, *, tile_b=None):
    """PyTorch-API wrapper: x (B, 13) -> (B, 13).

    Lane-sparse layout (13 < 128 lanes): prefer autoencoder_forward_t with a
    (13, B) layout end-to-end when the surrounding pipeline allows it.
    """
    batch, f = x.shape
    assert f == _F_IN
    if tile_b is None:
        tile_b = 2048                 # ~9 MiB padded VMEM footprint at this width
    if batch < 256:
        tb = batch                    # single full-extent block
    else:
        tb = min(_round_down_128(tile_b), _round_down_128((batch + 1) // 2))

    w1t, b1 = params["w1"].T, params["b1"].T    # (13,5), (1,5) -- tiny
    w2t, b2 = params["w2"].T, params["b2"].T
    w3t, b3 = params["w3"].T, params["b3"].T
    w4t, b4 = params["w4"].T, params["b4"].T

    latent = params["w2"].shape[0]
    flops = 2 * batch * (13 * 5 + 5 * latent + latent * 5 + 5 * 13)

    rep = lambda a: pl.BlockSpec(a.shape, lambda i: (0, 0))

    return pl.pallas_call(
        _autoencoder_kernel_rows,
        out_shape=jax.ShapeDtypeStruct((batch, 13), jnp.float32),
        grid=(pl.cdiv(batch, tb),),
        in_specs=[
            pl.BlockSpec((tb, 13), lambda i: (i, 0)),
            rep(w1t), rep(b1), rep(w2t), rep(b2),
            rep(w3t), rep(b3), rep(w4t), rep(b4),
        ],
        out_specs=pl.BlockSpec((tb, 13), lambda i: (i, 0)),
        compiler_params=pltpu.CompilerParams(
            dimension_semantics=("parallel",),
            vmem_limit_bytes=48 << 20),
        cost_estimate=pl.CostEstimate(
            flops=flops, transcendentals=0, bytes_accessed=2 * 13 * batch * 4),
    )(x, w1t, b1, w2t, b2, w3t, b3, w4t, b4)


# ----------------------------------------------------------------------------
# Parameters / reference
# ----------------------------------------------------------------------------
def init_params(key, latent_space):
    """nn.Linear-style init. Weights (out, in), biases (out, 1), U(-1/sqrt(in), 1/sqrt(in))."""
    if latent_space >= 5:
        raise Exception("latentent space cannot be the same dimension or "
                        "larger than intermediates")

    def linear(k, fan_in, fan_out):
        kw, kb = jax.random.split(k)
        bound = 1.0 / (fan_in ** 0.5)
        w = jax.random.uniform(kw, (fan_out, fan_in), jnp.float32, -bound, bound)
        b = jax.random.uniform(kb, (fan_out, 1), jnp.float32, -bound, bound)
        return w, b

    k1, k2, k3, k4 = jax.random.split(key, 4)
    w1, b1 = linear(k1, 13, 5)                # encoder Linear(13, 5)
    w2, b2 = linear(k2, 5, latent_space)      # encoder Linear(5, latent)
    w3, b3 = linear(k3, latent_space, 5)      # decoder Linear(latent, 5)
    w4, b4 = linear(k4, 5, 13)                # decoder Linear(5, 13)
    return dict(w1=w1, b1=b1, w2=w2, b2=b2, w3=w3, b3=b3, w4=w4, b4=b4)


def _reference_forward(x, p):
    """Plain-JAX reference on (B, 13) input, PyTorch semantics (ReLU after every Linear)."""
    relu = lambda t: jnp.maximum(t, 0.0)
    h = relu(x @ p["w1"].T + p["b1"].T)
    z = relu(h @ p["w2"].T + p["b2"].T)
    d = relu(z @ p["w3"].T + p["b3"].T)
    return relu(d @ p["w4"].T + p["b4"].T)


if __name__ == "__main__":
    latent_space = 3
    key = jax.random.PRNGKey(0)
    k_params, k_x = jax.random.split(key)
    params = init_params(k_params, latent_space)

    batch = 512
    x = jax.random.normal(k_x, (batch, 13), jnp.float32)
    ref = _reference_forward(x, params)

    # (1) Preferred transposed (13, B) path: lane-dense tiles, >= 2 parallel grid steps.
    out_t = jax.block_until_ready(autoencoder_forward_t(jnp.transpose(x), params))
    assert out_t.shape == (13, batch)
    assert jnp.allclose(out_t.T, ref, atol=1e-5, rtol=1e-5), "mismatch (transposed path)"

    # (2) Ragged small batch -> single full-extent block.
    x_small = x[:200]
    out_small = jax.block_until_ready(
        autoencoder_forward_t(jnp.transpose(x_small), params))
    assert jnp.allclose(out_small.T, _reference_forward(x_small, params),
                        atol=1e-5, rtol=1e-5), "mismatch (small batch)"

    # (3) PyTorch-API (B, 13) compatibility path (row-layout kernel, no
    #     full-array transposes anywhere in the graph).
    out_rows = jax.block_until_ready(autoencoder_forward(x, params))
    assert out_rows.shape == (batch, 13)
    assert jnp.allclose(out_rows, ref, atol=1e-5, rtol=1e-5), "mismatch (rows path)"

    print("KERNEL_OK")
</pallas_src>

<mosaic_0001>
module attributes {stable_mosaic.version = 11 : i64} {
  func.func @_autoencoder_kernel_t(%arg0: i32, %arg1: memref<13x256xf32, #tpu.memory_space<vmem>>, %arg2: memref<5x13xf32, #tpu.memory_space<vmem>>, %arg3: memref<5x1xf32, #tpu.memory_space<vmem>>, %arg4: memref<3x5xf32, #tpu.memory_space<vmem>>, %arg5: memref<3x1xf32, #tpu.memory_space<vmem>>, %arg6: memref<5x3xf32, #tpu.memory_space<vmem>>, %arg7: memref<5x1xf32, #tpu.memory_space<vmem>>, %arg8: memref<13x5xf32, #tpu.memory_space<vmem>>, %arg9: memref<13x1xf32, #tpu.memory_space<vmem>>, %arg10: memref<13x256xf32, #tpu.memory_space<vmem>>) attributes {dimension_semantics = [#tpu.dimension_semantics<parallel>], iteration_bounds = array<i64: 2>, scalar_prefetch = 0 : i64, scratch_operands = 0 : i64, tpu.core_type = #tpu.core_type<tc>, window_params = [{transform_indices = @transform_0, window_bounds = array<i64: 13, 256>}, {pipeline_mode = #tpu.pipeline_mode<synchronous>, transform_indices = @transform_1, window_bounds = array<i64: 5, 13>}, {pipeline_mode = #tpu.pipeline_mode<synchronous>, transform_indices = @transform_2, window_bounds = array<i64: 5, 1>}, {pipeline_mode = #tpu.pipeline_mode<synchronous>, transform_indices = @transform_3, window_bounds = array<i64: 3, 5>}, {pipeline_mode = #tpu.pipeline_mode<synchronous>, transform_indices = @transform_4, window_bounds = array<i64: 3, 1>}, {pipeline_mode = #tpu.pipeline_mode<synchronous>, transform_indices = @transform_5, window_bounds = array<i64: 5, 3>}, {pipeline_mode = #tpu.pipeline_mode<synchronous>, transform_indices = @transform_6, window_bounds = array<i64: 5, 1>}, {pipeline_mode = #tpu.pipeline_mode<synchronous>, transform_indices = @transform_7, window_bounds = array<i64: 13, 5>}, {pipeline_mode = #tpu.pipeline_mode<synchronous>, transform_indices = @transform_8, window_bounds = array<i64: 13, 1>}, {transform_indices = @transform_9, window_bounds = array<i64: 13, 256>}]} {
    %c0 = arith.constant 0 : index
    %c0_0 = arith.constant 0 : index
    %0 = vector.load %arg1[%c0, %c0_0] : memref<13x256xf32, #tpu.memory_space<vmem>>, vector<13x256xf32>
    %c0_1 = arith.constant 0 : index
    %c0_2 = arith.constant 0 : index
    %1 = vector.load %arg2[%c0_1, %c0_2] : memref<5x13xf32, #tpu.memory_space<vmem>>, vector<5x13xf32>
    %cst = arith.constant dense<0.000000e+00> : vector<5x256xf32>
    %2 = tpu.matmul %1, %0, %cst {dimension_numbers = #tpu.dot_dimension_numbers<[1], [0], [0], [1], [0, 0, 1, 1], [], []>} : vector<5x13xf32>, vector<13x256xf32>, vector<5x256xf32> -> vector<5x256xf32>
    %c0_3 = arith.constant 0 : index
    %c0_4 = arith.constant 0 : index
    %3 = vector.load %arg3[%c0_3, %c0_4] : memref<5x1xf32, #tpu.memory_space<vmem>>, vector<5x1xf32>
    %4 = vector.broadcast %3 : vector<5x1xf32> to vector<5x256xf32>
    %5 = arith.addf %2, %4 : vector<5x256xf32>
    %cst_5 = arith.constant 0.000000e+00 : f32
    %6 = vector.broadcast %cst_5 : f32 to vector<5x256xf32>
    %7 = arith.maximumf %5, %6 : vector<5x256xf32>
    %c0_6 = arith.constant 0 : index
    %c0_7 = arith.constant 0 : index
    %8 = vector.load %arg4[%c0_6, %c0_7] : memref<3x5xf32, #tpu.memory_space<vmem>>, vector<3x5xf32>
    %cst_8 = arith.constant dense<0.000000e+00> : vector<3x256xf32>
    %9 = tpu.matmul %8, %7, %cst_8 {dimension_numbers = #tpu.dot_dimension_numbers<[1], [0], [0], [1], [0, 0, 1, 1], [], []>} : vector<3x5xf32>, vector<5x256xf32>, vector<3x256xf32> -> vector<3x256xf32>
    %c0_9 = arith.constant 0 : index
    %c0_10 = arith.constant 0 : index
    %10 = vector.load %arg5[%c0_9, %c0_10] : memref<3x1xf32, #tpu.memory_space<vmem>>, vector<3x1xf32>
    %11 = vector.broadcast %10 : vector<3x1xf32> to vector<3x256xf32>
    %12 = arith.addf %9, %11 : vector<3x256xf32>
    %cst_11 = arith.constant 0.000000e+00 : f32
    %13 = vector.broadcast %cst_11 : f32 to vector<3x256xf32>
    %14 = arith.maximumf %12, %13 : vector<3x256xf32>
    %c0_12 = arith.constant 0 : index
    %c0_13 = arith.constant 0 : index
    %15 = vector.load %arg6[%c0_12, %c0_13] : memref<5x3xf32, #tpu.memory_space<vmem>>, vector<5x3xf32>
    %cst_14 = arith.constant dense<0.000000e+00> : vector<5x256xf32>
    %16 = tpu.matmul %15, %14, %cst_14 {dimension_numbers = #tpu.dot_dimension_numbers<[1], [0], [0], [1], [0, 0, 1, 1], [], []>} : vector<5x3xf32>, vector<3x256xf32>, vector<5x256xf32> -> vector<5x256xf32>
    %c0_15 = arith.constant 0 : index
    %c0_16 = arith.constant 0 : index
    %17 = vector.load %arg7[%c0_15, %c0_16] : memref<5x1xf32, #tpu.memory_space<vmem>>, vector<5x1xf32>
    %18 = vector.broadcast %17 : vector<5x1xf32> to vector<5x256xf32>
    %19 = arith.addf %16, %18 : vector<5x256xf32>
    %cst_17 = arith.constant 0.000000e+00 : f32
    %20 = vector.broadcast %cst_17 : f32 to vector<5x256xf32>
    %21 = arith.maximumf %19, %20 : vector<5x256xf32>
    %c0_18 = arith.constant 0 : index
    %c0_19 = arith.constant 0 : index
    %22 = vector.load %arg8[%c0_18, %c0_19] : memref<13x5xf32, #tpu.memory_space<vmem>>, vector<13x5xf32>
    %cst_20 = arith.constant dense<0.000000e+00> : vector<13x256xf32>
    %23 = tpu.matmul %22, %21, %cst_20 {dimension_numbers = #tpu.dot_dimension_numbers<[1], [0], [0], [1], [0, 0, 1, 1], [], []>} : vector<13x5xf32>, vector<5x256xf32>, vector<13x256xf32> -> vector<13x256xf32>
    %c0_21 = arith.constant 0 : index
    %c0_22 = arith.constant 0 : index
    %24 = vector.load %arg9[%c0_21, %c0_22] : memref<13x1xf32, #tpu.memory_space<vmem>>, vector<13x1xf32>
    %25 = vector.broadcast %24 : vector<13x1xf32> to vector<13x256xf32>
    %26 = arith.addf %23, %25 : vector<13x256xf32>
    %cst_23 = arith.constant 0.000000e+00 : f32
    %27 = vector.broadcast %cst_23 : f32 to vector<13x256xf32>
    %28 = arith.maximumf %26, %27 : vector<13x256xf32>
    %c0_24 = arith.constant 0 : index
    %c0_25 = arith.constant 0 : index
    %29 = vector.load %arg10[%c0_24, %c0_25] : memref<13x256xf32, #tpu.memory_space<vmem>>, vector<13x256xf32>
    tpu.vector_store %arg10[%c0_24, %c0_25], %28 {strides = array<i32>} : memref<13x256xf32, #tpu.memory_space<vmem>>, vector<13x256xf32>,
    return
  }
  func.func @transform_0(%arg0: i32) -> (i32, i32) {
    %c0_i32 = arith.constant 0 : i32
    %c0_i32_0 = arith.constant 0 : i32
    return %c0_i32, %arg0 : i32, i32
  }
  func.func @transform_1(%arg0: i32) -> (i32, i32) {
    %c0_i32 = arith.constant 0 : i32
    %c0_i32_0 = arith.constant 0 : i32
    %c0_i32_1 = arith.constant 0 : i32
    return %c0_i32, %c0_i32_0 : i32, i32
  }
  func.func @transform_2(%arg0: i32) -> (i32, i32) {
    %c0_i32 = arith.constant 0 : i32
    %c0_i32_0 = arith.constant 0 : i32
    %c0_i32_1 = arith.constant 0 : i32
    return %c0_i32, %c0_i32_0 : i32, i32
  }
  func.func @transform_3(%arg0: i32) -> (i32, i32) {
    %c0_i32 = arith.constant 0 : i32
    %c0_i32_0 = arith.constant 0 : i32
    %c0_i32_1 = arith.constant 0 : i32
    return %c0_i32, %c0_i32_0 : i32, i32
  }
  func.func @transform_4(%arg0: i32) -> (i32, i32) {
    %c0_i32 = arith.constant 0 : i32
    %c0_i32_0 = arith.constant 0 : i32
    %c0_i32_1 = arith.constant 0 : i32
    return %c0_i32, %c0_i32_0 : i32, i32
  }
  func.func @transform_5(%arg0: i32) -> (i32, i32) {
    %c0_i32 = arith.constant 0 : i32
    %c0_i32_0 = arith.constant 0 : i32
    %c0_i32_1 = arith.constant 0 : i32
    return %c0_i32, %c0_i32_0 : i32, i32
  }
  func.func @transform_6(%arg0: i32) -> (i32, i32) {
    %c0_i32 = arith.constant 0 : i32
    %c0_i32_0 = arith.constant 0 : i32
    %c0_i32_1 = arith.constant 0 : i32
    return %c0_i32, %c0_i32_0 : i32, i32
  }
  func.func @transform_7(%arg0: i32) -> (i32, i32) {
    %c0_i32 = arith.constant 0 : i32
    %c0_i32_0 = arith.constant 0 : i32
    %c0_i32_1 = arith.constant 0 : i32
    return %c0_i32, %c0_i32_0 : i32, i32
  }
  func.func @transform_8(%arg0: i32) -> (i32, i32) {
    %c0_i32 = arith.constant 0 : i32
    %c0_i32_0 = arith.constant 0 : i32
    %c0_i32_1 = arith.constant 0 : i32
    return %c0_i32, %c0_i32_0 : i32, i32
  }
  func.func @transform_9(%arg0: i32) -> (i32, i32) {
    %c0_i32 = arith.constant 0 : i32
    %c0_i32_0 = arith.constant 0 : i32
    return %c0_i32, %arg0 : i32, i32
  }
}

</mosaic_0001>

<llo_original>
// kernel: autoencoder_forward_t.1
$region0: #{autoencoder_forward_t.1}
  #allocation0 [shape = 'u32[]', space=smem, size = 0x4, offset = 0x4, fixed_abs, tag = 'smem constant byte address 0x4 - core index']
  #allocation1 [shape = 'u32[72,128]{1,0:T(1,128)}', space=vmem, size = 0x9000, scoped, tag = 'internal scratch']
  %s0 = inlined_call_operand.vmem [shape: f32[13,512], index: 0, kind: input, shape index: {}]
  %s1 = inlined_call_operand.vmem [shape: f32[5,13], index: 1, kind: input, shape index: {}]
  %s2 = inlined_call_operand.vmem [shape: f32[5,1], index: 2, kind: input, shape index: {}]
  %s3 = inlined_call_operand.hbm [shape: f32[3,5], index: 3, kind: input, shape index: {}]
  %s4 = inlined_call_operand.vmem [shape: f32[3,1], index: 4, kind: input, shape index: {}]
  %s5 = inlined_call_operand.vmem [shape: f32[5,3], index: 5, kind: input, shape index: {}]
  %s6 = inlined_call_operand.vmem [shape: f32[5,1], index: 6, kind: input, shape index: {}]
  %s7 = inlined_call_operand.vmem [shape: f32[13,5], index: 7, kind: input, shape index: {}]
  %s8 = inlined_call_operand.vmem [shape: f32[13,1], index: 8, kind: input, shape index: {}]
  %s9 = inlined_call_operand.hbm [shape: f32[13,512], index: 9, kind: output, shape index: {}]
  %s10 = sld [smem:[#allocation0]]
  $region96: #{autoencoder_forward_t.1} parent=0
    _
  %s12 = ssub.s32 1, %s10
  %s13 = scalar_select 0, %s12, %s10
  $region1: #{autoencoder_forward_t.1} parent=0
    #allocation2 [shape = 'u8[32768]{0}', space=vmem, size = 0x8000, scoped, tag = 'input window, operand 0']
    #allocation3 [shape = 'u8[2048]{0}', space=vmem, size = 0x800, scoped, tag = 'input window, operand 3, single buffered']
    #allocation4 [shape = 's32[2]{0}', space=sflag, size = 0x8, scoped, tag = 'scoped memory for autoencoder_forward_t.1']
    #allocation5 [shape = 's32[2]{0}', space=sflag, size = 0x8, scoped, tag = 'scoped memory for autoencoder_forward_t.1']
    #allocation6 [shape = 'u8[32768]{0}', space=vmem, size = 0x8000, scoped, tag = 'output window, operand 0']
    %14 = vsyncpa [#allocation4], 0
    %15 = vsyncpa [#allocation5], 0
    %s16 = scalar_lea.sflag [#allocation5], 1
    %17 = vsyncpa %s16, 0
    loop: start=0, step=1, limit=4
    $region2: #{autoencoder_forward_t.1} parent=1 // loop_pre_header
      _
    $region3: #{autoencoder_forward_t.1} parent=1 // loop_header
      %s19 = sphi 0, %s23
      %p20 = scmp.ge.s32.totalorder %s19, 4
      %s29 = sphi 0, %s31
      %s32 = sphi 0, %s29
      %s33 = sphi 0, %s32
      %s49 = sphi 0, %s33
      %s53 = sphi 0, %s53
      %s55 = sphi 0, %s53
      %s56 = sphi 0, %s55
      %s70 = sphi 0, %s56
      %s74 = sphi 0, %s74
      %s76 = sphi 0, %s74
      %s77 = sphi 0, %s76
      %s91 = sphi 0, %s77
      %s95 = sphi 0, %s95
      %s97 = sphi 0, %s95
      %s98 = sphi 0, %s97
      %s112 = sphi 0, %s98
      %s116 = sphi 0, %s116
      %s118 = sphi 0, %s116
      %s119 = sphi 0, %s118
      %s133 = sphi 0, %s119
      %s137 = sphi 0, %s137
      %s139 = sphi 0, %s137
      %s140 = sphi 0, %s139
      %s154 = sphi 0, %s140
      %s158 = sphi 0, %s158
      %s160 = sphi 0, %s158
      %s161 = sphi 0, %s160
      %s175 = sphi 0, %s161
      %s179 = sphi 0, %s179
      %s181 = sphi 0, %s179
      %s182 = sphi 0, %s181
      %s196 = sphi 0, %s182
      %s200 = sphi 0, %s200
      %s202 = sphi 0, %s200
      %s203 = sphi 0, %s202
      %s217 = sphi 0, %s203
      %s223 = sphi 0, %s225
      %s226 = sphi 0, %s223
      %s227 = sphi 0, %s226
      %s243 = sphi 0, %s227
    $region4: #{autoencoder_forward_t.1} parent=1 // loop_header_branch
      %22 = sbr.rel (%p20) target = $region8
    $region5: #{autoencoder_forward_t.1} parent=1 // loop_body
      %s24 = ssub.s32 %s19, 1
      %s25 = ssub.s32 %s19, 2
      %s26 = sadd.s32 %s19, 1
      %s27 = ssub.s32 %s19, %s26
      %p28 = scmp.eq.s32.totalorder %s27, 0
      %s30 = sadd.s32 %s29, 1
      %s31 = scalar_select %p28, %s29, %s30
      %p34 = pneg %p28
      %p35 = scmp.eq.s32.totalorder %s19, 1
      %p36 = por %p34, %p35
      %p37 = scmp.ne.s32.totalorder %s29, %s32
      %p38 = scmp.eq.s32.totalorder %s19, 0
      %p39 = por %p37, %p38
      %p40 = scmp.ne.s32.totalorder %s29, %s32
      %p41 = scmp.eq.s32.totalorder %s24, 1
      %p42 = por %p40, %p41
      %p43 = scmp.ne.s32.totalorder %s32, %s33
      %p44 = scmp.eq.s32.totalorder %s24, 0
      %p45 = por %p43, %p44
      %p46 = scmp.ne.s32.totalorder %s32, %s33
      %p47 = scmp.eq.s32.totalorder %s25, 1
      %p48 = por %p46, %p47
      %p50 = scmp.ne.s32.totalorder %s33, %s49
      %p51 = scmp.eq.s32.totalorder %s25, 0
      %p52 = por %p50, %p51
      %s54 = sadd.s32 %s53, 1
      %p57 = scmp.eq.s32.totalorder %s19, 1
      %p58 = scmp.ne.s32.totalorder %s53, %s55
      %p59 = scmp.eq.s32.totalorder %s19, 0
      %p60 = por %p58, %p59
      %p61 = scmp.ne.s32.totalorder %s53, %s55
      %p62 = scmp.eq.s32.totalorder %s24, 1
      %p63 = por %p61, %p62
      %p64 = scmp.ne.s32.totalorder %s55, %s56
      %p65 = scmp.eq.s32.totalorder %s24, 0
      %p66 = por %p64, %p65
      %p67 = scmp.ne.s32.totalorder %s55, %s56
      %p68 = scmp.eq.s32.totalorder %s25, 1
      %p69 = por %p67, %p68
      %p71 = scmp.ne.s32.totalorder %s56, %s70
      %p72 = scmp.eq.s32.totalorder %s25, 0
      %p73 = por %p71, %p72
      %s75 = sadd.s32 %s74, 1
      %p78 = scmp.eq.s32.totalorder %s19, 1
      %p79 = scmp.ne.s32.totalorder %s74, %s76
      %p80 = scmp.eq.s32.totalorder %s19, 0
      %p81 = por %p79, %p80
      %p82 = scmp.ne.s32.totalorder %s74, %s76
      %p83 = scmp.eq.s32.totalorder %s24, 1
      %p84 = por %p82, %p83
      %p85 = scmp.ne.s32.totalorder %s76, %s77
      %p86 = scmp.eq.s32.totalorder %s24, 0
      %p87 = por %p85, %p86
      %p88 = scmp.ne.s32.totalorder %s76, %s77
      %p89 = scmp.eq.s32.totalorder %s25, 1
      %p90 = por %p88, %p89
      %p92 = scmp.ne.s32.totalorder %s77, %s91
      %p93 = scmp.eq.s32.totalorder %s25, 0
      %p94 = por %p92, %p93
      %s96 = sadd.s32 %s95, 1
      %p99 = scmp.eq.s32.totalorder %s19, 1
      %p100 = scmp.ne.s32.totalorder %s95, %s97
      %p101 = scmp.eq.s32.totalorder %s19, 0
      %p102 = por %p100, %p101
      %p103 = scmp.ne.s32.totalorder %s95, %s97
      %p104 = scmp.eq.s32.totalorder %s24, 1
      %p105 = por %p103, %p104
      %p106 = scmp.ne.s32.totalorder %s97, %s98
      %p107 = scmp.eq.s32.totalorder %s24, 0
      %p108 = por %p106, %p107
      %p109 = scmp.ne.s32.totalorder %s97, %s98
      %p110 = scmp.eq.s32.totalorder %s25, 1
      %p111 = por %p109, %p110
      %p113 = scmp.ne.s32.totalorder %s98, %s112
      %p114 = scmp.eq.s32.totalorder %s25, 0
      %p115 = por %p113, %p114
      %s117 = sadd.s32 %s116, 1
      %p120 = scmp.eq.s32.totalorder %s19, 1
      %p121 = scmp.ne.s32.totalorder %s116, %s118
      %p122 = scmp.eq.s32.totalorder %s19, 0
      %p123 = por %p121, %p122
      %p124 = scmp.ne.s32.totalorder %s116, %s118
      %p125 = scmp.eq.s32.totalorder %s24, 1
      %p126 = por %p124, %p125
      %p127 = scmp.ne.s32.totalorder %s118, %s119
      %p128 = scmp.eq.s32.totalorder %s24, 0
      %p129 = por %p127, %p128
      %p130 = scmp.ne.s32.totalorder %s118, %s119
      %p131 = scmp.eq.s32.totalorder %s25, 1
      %p132 = por %p130, %p131
      %p134 = scmp.ne.s32.totalorder %s119, %s133
      %p135 = scmp.eq.s32.totalorder %s25, 0
      %p136 = por %p134, %p135
      %s138 = sadd.s32 %s137, 1
      %p141 = scmp.eq.s32.totalorder %s19, 1
      %p142 = scmp.ne.s32.totalorder %s137, %s139
      %p143 = scmp.eq.s32.totalorder %s19, 0
      %p144 = por %p142, %p143
      %p145 = scmp.ne.s32.totalorder %s137, %s139
      %p146 = scmp.eq.s32.totalorder %s24, 1
      %p147 = por %p145, %p146
      %p148 = scmp.ne.s32.totalorder %s139, %s140
      %p149 = scmp.eq.s32.totalorder %s24, 0
      %p150 = por %p148, %p149
      %p151 = scmp.ne.s32.totalorder %s139, %s140
      %p152 = scmp.eq.s32.totalorder %s25, 1
      %p153 = por %p151, %p152
      %p155 = scmp.ne.s32.totalorder %s140, %s154
      %p156 = scmp.eq.s32.totalorder %s25, 0
      %p157 = por %p155, %p156
      %s159 = sadd.s32 %s158, 1
      %p162 = scmp.eq.s32.totalorder %s19, 1
      %p163 = scmp.ne.s32.totalorder %s158, %s160
      %p164 = scmp.eq.s32.totalorder %s19, 0
      %p165 = por %p163, %p164
      %p166 = scmp.ne.s32.totalorder %s158, %s160
      %p167 = scmp.eq.s32.totalorder %s24, 1
      %p168 = por %p166, %p167
      %p169 = scmp.ne.s32.totalorder %s160, %s161
      %p170 = scmp.eq.s32.totalorder %s24, 0
      %p171 = por %p169, %p170
      %p172 = scmp.ne.s32.totalorder %s160, %s161
      %p173 = scmp.eq.s32.totalorder %s25, 1
      %p174 = por %p172, %p173
      %p176 = scmp.ne.s32.totalorder %s161, %s175
      %p177 = scmp.eq.s32.totalorder %s25, 0
      %p178 = por %p176, %p177
      %s180 = sadd.s32 %s179, 1
      %p183 = scmp.eq.s32.totalorder %s19, 1
      %p184 = scmp.ne.s32.totalorder %s179, %s181
      %p185 = scmp.eq.s32.totalorder %s19, 0
      %p186 = por %p184, %p185
      %p187 = scmp.ne.s32.totalorder %s179, %s181
      %p188 = scmp.eq.s32.totalorder %s24, 1
      %p189 = por %p187, %p188
      %p190 = scmp.ne.s32.totalorder %s181, %s182
      %p191 = scmp.eq.s32.totalorder %s24, 0
      %p192 = por %p190, %p191
      %p193 = scmp.ne.s32.totalorder %s181, %s182
      %p194 = scmp.eq.s32.totalorder %s25, 1
      %p195 = por %p193, %p194
      %p197 = scmp.ne.s32.totalorder %s182, %s196
      %p198 = scmp.eq.s32.totalorder %s25, 0
      %p199 = por %p197, %p198
      %s201 = sadd.s32 %s200, 1
      %p204 = scmp.eq.s32.totalorder %s19, 1
      %p205 = scmp.ne.s32.totalorder %s200, %s202
      %p206 = scmp.eq.s32.totalorder %s19, 0
      %p207 = por %p205, %p206
      %p208 = scmp.ne.s32.totalorder %s200, %s202
      %p209 = scmp.eq.s32.totalorder %s24, 1
      %p210 = por %p208, %p209
      %p211 = scmp.ne.s32.totalorder %s202, %s203
      %p212 = scmp.eq.s32.totalorder %s24, 0
      %p213 = por %p211, %p212
      %p214 = scmp.ne.s32.totalorder %s202, %s203
      %p215 = scmp.eq.s32.totalorder %s25, 1
      %p216 = por %p214, %p215
      %p218 = scmp.ne.s32.totalorder %s203, %s217
      %p219 = scmp.eq.s32.totalorder %s25, 0
      %p220 = por %p218, %p219
      %s221 = ssub.s32 %s19, %s26
      %p222 = scmp.eq.s32.totalorder %s221, 0
      %s224 = sadd.s32 %s223, 1
      %s225 = scalar_select %p222, %s223, %s224
      %p228 = pneg %p222
      %p229 = scmp.eq.s32.totalorder %s19, 1
      %p230 = por %p228, %p229
      %p231 = scmp.ne.s32.totalorder %s223, %s226
      %p232 = scmp.eq.s32.totalorder %s19, 0
      %p233 = por %p231, %p232
      %p234 = scmp.ne.s32.totalorder %s223, %s226
      %p235 = scmp.eq.s32.totalorder %s24, 1
      %p236 = por %p234, %p235
      %p237 = scmp.ne.s32.totalorder %s226, %s227
      %p238 = scmp.eq.s32.totalorder %s24, 0
      %p239 = por %p237, %p238
      %p240 = scmp.ne.s32.totalorder %s226, %s227
      %p241 = scmp.eq.s32.totalorder %s25, 1
      %p242 = por %p240, %p241
      %p244 = scmp.ne.s32.totalorder %s227, %s243
      %p245 = scmp.eq.s32.totalorder %s25, 0
      %p246 = por %p244, %p245
      %p247 = scmp.le.s32.totalorder 1, %s19
      %p248 = scmp.lt.s32.totalorder %s19, 3
      %p249 = pnand %p247, %p248
      %p250 = pneg %p249
      // Predicated region
      $region9: #{autoencoder_forward_t.1} parent=5 // pred_check
        _
      $region10: #{autoencoder_forward_t.1} parent=5 // pred_check_branch
        %252 = sbr.rel (%p249) target = $region12
      $region11: #{autoencoder_forward_t.1} parent=5 // pred_region
        %s253 = ssub.s32 %s19, 1
        // Predicated region
        $region13: #{autoencoder_forward_t.1} parent=11 // pred_check
          %p254 = pneg %p66
        $region14: #{autoencoder_forward_t.1} parent=11 // pred_check_branch
          %256 = sbr.rel (%p254) target = $region16
        $region15: #{autoencoder_forward_t.1} parent=11 // pred_region
          _
        $region16: #{autoencoder_forward_t.1} parent=11 // pred_fallthru
          _
        // Predicated region
        $region17: #{autoencoder_forward_t.1} parent=11 // pred_check
          %p257 = pneg %p87
        $region18: #{autoencoder_forward_t.1} parent=11 // pred_check_branch
          %259 = sbr.rel (%p257) target = $region20
        $region19: #{autoencoder_forward_t.1} parent=11 // pred_region
          _
        $region20: #{autoencoder_forward_t.1} parent=11 // pred_fallthru
          _
        // Predicated region
        $region21: #{autoencoder_forward_t.1} parent=11 // pred_check
          %p260 = pneg %p108
        $region22: #{autoencoder_forward_t.1} parent=11 // pred_check_branch
          %262 = sbr.rel (%p260) target = $region24
        $region23: #{autoencoder_forward_t.1} parent=11 // pred_region
          %264 = vsyncadd [#allocation4], 0
          %s266 = sshll.u32 %s3, 4
          %s267 = int_to_ptr.hbm [resolvable:$true] %s266
          %s268 = sshll.u32 [#allocation3], 4
          %s269 = int_to_ptr.vmem [resolvable:$true] %s268
          %271 = dma.hbm_to_vmem [thread:$0]  %s267, 64, %s269, [#allocation4]
        $region24: #{autoencoder_forward_t.1} parent=11 // pred_fallthru
          _
        // Predicated region
        $region25: #{autoencoder_forward_t.1} parent=11 // pred_check
          %p272 = pneg %p129
        $region26: #{autoencoder_forward_t.1} parent=11 // pred_check_branch
          %274 = sbr.rel (%p272) target = $region28
        $region27: #{autoencoder_forward_t.1} parent=11 // pred_region
          _
        $region28: #{autoencoder_forward_t.1} parent=11 // pred_fallthru
          _
        // Predicated region
        $region29: #{autoencoder_forward_t.1} parent=11 // pred_check
          %p275 = pneg %p150
        $region30: #{autoencoder_forward_t.1} parent=11 // pred_check_branch
          %277 = sbr.rel (%p275) target = $region32
        $region31: #{autoencoder_forward_t.1} parent=11 // pred_region
          _
        $region32: #{autoencoder_forward_t.1} parent=11 // pred_fallthru
          _
        // Predicated region
        $region33: #{autoencoder_forward_t.1} parent=11 // pred_check
          %p278 = pneg %p171
        $region34: #{autoencoder_forward_t.1} parent=11 // pred_check_branch
          %280 = sbr.rel (%p278) target = $region36
        $region35: #{autoencoder_forward_t.1} parent=11 // pred_region
          _
        $region36: #{autoencoder_forward_t.1} parent=11 // pred_fallthru
          _
        // Predicated region
        $region37: #{autoencoder_forward_t.1} parent=11 // pred_check
          %p281 = pneg %p192
        $region38: #{autoencoder_forward_t.1} parent=11 // pred_check_branch
          %283 = sbr.rel (%p281) target = $region40
        $region39: #{autoencoder_forward_t.1} parent=11 // pred_region
          _
        $region40: #{autoencoder_forward_t.1} parent=11 // pred_fallthru
          _
        // Predicated region
        $region41: #{autoencoder_forward_t.1} parent=11 // pred_check
          %p284 = pneg %p213
        $region42: #{autoencoder_forward_t.1} parent=11 // pred_check_branch
          %286 = sbr.rel (%p284) target = $region44
        $region43: #{autoencoder_forward_t.1} parent=11 // pred_region
          _
        $region44: #{autoencoder_forward_t.1} parent=11 // pred_fallthru
          _
      $region12: #{autoencoder_forward_t.1} parent=5 // pred_fallthru
        _
      %p287 = scmp.lt.s32.totalorder %s19, 2
      // Predicated region
      $region45: #{autoencoder_forward_t.1} parent=5 // pred_check
        %p288 = pneg %p287
      $region46: #{autoencoder_forward_t.1} parent=5 // pred_check_branch
        %290 = sbr.rel (%p288) target = $region48
      $region47: #{autoencoder_forward_t.1} parent=5 // pred_region
        // Predicated region
        $region49: #{autoencoder_forward_t.1} parent=47 // pred_check
          %p291 = pneg %p39
        $region50: #{autoencoder_forward_t.1} parent=47 // pred_check_branch
          %293 = sbr.rel (%p291) target = $region52
        $region51: #{autoencoder_forward_t.1} parent=47 // pred_region
          %s294 = sand.u32 %s29, 1
          %s295 = sand.u32 %s29, 1
          %s296 = smul.addr %s295, 32
          %s297 = scalar_lea.vmem [#allocation2], %s296
          %s298 = smul.u32 2, %s19
          %s299 = smul.addr %s298, 8
          %s300 = scalar_lea.vmem %s0, %s299
          // Predicated region
          $region53: #{autoencoder_forward_t.1} parent=51 // pred_check
            _
          $region54: #{autoencoder_forward_t.1} parent=51 // pred_check_branch
            %302 = sbr.rel (0) target = $region56
          $region55: #{autoencoder_forward_t.1} parent=51 // pred_region
            // Predicated region
            $region57: #{autoencoder_forward_t.1} parent=55 // pred_check
              _
            $region58: #{autoencoder_forward_t.1} parent=55 // pred_check_branch
              %304 = sbr.rel (0) target = $region60
            $region59: #{autoencoder_forward_t.1} parent=55 // pred_region
              loop: start=0, step=1, limit=1
              $region61: #{autoencoder_forward_t.1} parent=59 // loop_pre_header
                _
              $region62: #{autoencoder_forward_t.1} parent=59 // loop_header
                %s306 = sphi 0, %s310
                %p307 = scmp.ge.s32.totalorder %s306, 1
                %s311 = sphi %s300, %s300
                %s312 = sphi %s297, %s297
              $region63: #{autoencoder_forward_t.1} parent=59 // loop_header_branch
                %309 = sbr.rel (%p307) target = $region67
              $region64: #{autoencoder_forward_t.1} parent=59 // loop_body
                %v313 = vld [vmem:[%s311] sm:$0xff]
                %314 = vst [vmem:[%s312] sm:$0xff] %v313
                %v315 = vld [vmem:[%s311 + $0x8] sm:$0xff]
                %316 = vst [vmem:[%s312 + $0x8] sm:$0xff] %v315
                %v317 = vld [vmem:[%s311 + $0x20] sm:$0xff]
                %318 = vst [vmem:[%s312 + $0x10] sm:$0xff] %v317
                %v319 = vld [vmem:[%s311 + $0x28] sm:$0xff]
                %320 = vst [vmem:[%s312 + $0x18] sm:$0xff] %v319
              $region65: #{autoencoder_forward_t.1} parent=59 // loop_footer
                %s310 = sadd.s32 1, %s306
              $region66: #{autoencoder_forward_t.1} parent=59 // loop_footer_branch
                %305 = sbr.rel target = $region62
              $region67: #{autoencoder_forward_t.1} parent=59 // loop_exit
                _
            $region60: #{autoencoder_forward_t.1} parent=55 // pred_fallthru
              _
            // Predicated region
            $region68: #{autoencoder_forward_t.1} parent=55 // pred_check
              _
            $region69: #{autoencoder_forward_t.1} parent=55 // pred_check_branch
              %322 = sbr.rel target = $region71
            $region70: #{autoencoder_forward_t.1} parent=55 // pred_region
              _
            $region71: #{autoencoder_forward_t.1} parent=55 // pred_fallthru
              _
          $region56: #{autoencoder_forward_t.1} parent=51 // pred_fallthru
            _
          %323 = vnop
        $region52: #{autoencoder_forward_t.1} parent=47 // pred_fallthru
          _
      $region48: #{autoencoder_forward_t.1} parent=5 // pred_fallthru
        _
      %p324 = scmp.le.s32.totalorder 1, %s19
      %p325 = scmp.lt.s32.totalorder %s19, 3
      %p326 = pnand %p324, %p325
      %p327 = pneg %p326
      // Predicated region
      $region72: #{autoencoder_forward_t.1} parent=5 // pred_check
        _
      $region73: #{autoencoder_forward_t.1} parent=5 // pred_check_branch
        %329 = sbr.rel (%p326) target = $region75
      $region74: #{autoencoder_forward_t.1} parent=5 // pred_region
        %s330 = ssub.s32 %s19, 1
        %s331 = sand.u32 %s32, 1
        %s332 = sand.u32 %s32, 1
        %s333 = smul.addr %s332, 32
        %s334 = scalar_lea.vmem [#allocation2], %s333
        // Predicated region
        $region76: #{autoencoder_forward_t.1} parent=74 // pred_check
          %p335 = pneg %p45
        $region77: #{autoencoder_forward_t.1} parent=74 // pred_check_branch
          %337 = sbr.rel (%p335) target = $region79
        $region78: #{autoencoder_forward_t.1} parent=74 // pred_region
          _
        $region79: #{autoencoder_forward_t.1} parent=74 // pred_fallthru
          _
        // Predicated region
        $region80: #{autoencoder_forward_t.1} parent=74 // pred_check
          %p338 = pneg %p108
        $region81: #{autoencoder_forward_t.1} parent=74 // pred_check_branch
          %340 = sbr.rel (%p338) target = $region83
        $region82: #{autoencoder_forward_t.1} parent=74 // pred_region
          %342 = dma.done [#allocation4], 64
        $region83: #{autoencoder_forward_t.1} parent=74 // pred_fallthru
          _
        %s343 = sand.u32 %s32, 1
        %s344 = sand.u32 %s32, 1
        %s345 = smul.addr %s344, 32
        %s346 = scalar_lea.vmem [#allocation2], %s345
        %p347 = pneg %p45
        %p348 = pneg %p42
        %p349 = pneg %p66
        %p350 = pneg %p63
        %p351 = pneg %p87
        %p352 = pneg %p84
        %p353 = pneg %p108
        %p354 = pneg %p105
        %p355 = pneg %p129
        %p356 = pneg %p126
        %p357 = pneg %p150
        %p358 = pneg %p147
        %p359 = pneg %p171
        %p360 = pneg %p168
        %p361 = pneg %p192
        %p362 = pneg %p189
        %p363 = pneg %p213
        %p364 = pneg %p210
        %p365 = pneg %p239
        %p366 = pneg %p236
        %s367 = sand.u32 %s226, 1
        %s368 = scalar_lea.sflag [#allocation5], %s367
        %s369 = sand.u32 %s226, 1
        %s370 = smul.addr %s369, 32
        %s371 = scalar_lea.vmem [#allocation6], %s370
        %s372 = smul.u32 2, %s24
        %s373 = smul.u32 2, %s24
        %v374 = vld [vmem:[%s334] sm:$0xff]
        %v375 = vld [vmem:[%s334 + $0x8] sm:$0xff]
        %v376 = vld [vmem:[%s334 + $0x10] sm:$0x1f]
        %v377 = vld [vmem:[%s334 + $0x18] sm:$0x1f]
        %v378 = vld [vmem:[%s1] sm:$0x1f]
        %v379 = vld [vmem:[%s2] sm:$0x1f]
        %381 = vset.pattern.permute.xlu0 0
        %382 = vperm.xlu0 %381, %v379
        %v383 = vpop.permute.xlu0 %382
        %vm385 = vcmask 105472
        %v387 = vsel %vm385, %v378, 0
        %vm389 = vcmask 1044480
        %v391 = vsel %vm389, %v376, 0
        %v394 = vsel %vm389, %v377, 0
        %396 = vmatpush.msra.mxu0 0.0
        %397 = vmatpush.msra.mxu0 0.0
        %398 = vmatpush.msra.mxu0 0.0
        %399 = vmatpush.msra.mxu0 0.0
        %400 = vmatpush.msra.mxu0 0.0
        %401 = vmatpush.msra.mxu0 0.0
        %402 = vmatpush.msra.mxu0 0.0
        %403 = vmatpush.msra.mxu0 0.0
        %404 = vmatpush.msra.mxu0 0.0
        %405 = vmatpush.msra.mxu0 0.0
        %406 = vmatpush.msra.mxu0 0.0
        %407 = vmatpush.msra.mxu0 0.0
        %408 = vmatpush.msra.mxu0 0.0
        %409 = vmatpush.msra.mxu0 0.0
        %410 = vmatpush.msra.mxu0 %v391
        %411 = vmatpush.msra.mxu0 %v374
        %412 = vmatmul.f32.gmra.mxu0 %v387
        %v413 = vpop.f32.mrf.mxu0
        %v414 = vadd.f32 %v383, %v413
        %415 = vdwg.mxu0
        %416 = vmatpush.msra.mxu0 0.0
        %417 = vmatpush.msra.mxu0 0.0
        %418 = vmatpush.msra.mxu0 0.0
        %419 = vmatpush.msra.mxu0 0.0
        %420 = vmatpush.msra.mxu0 0.0
        %421 = vmatpush.msra.mxu0 0.0
        %422 = vmatpush.msra.mxu0 0.0
        %423 = vmatpush.msra.mxu0 0.0
        %424 = vmatpush.msra.mxu0 0.0
        %425 = vmatpush.msra.mxu0 0.0
        %426 = vmatpush.msra.mxu0 0.0
        %427 = vmatpush.msra.mxu0 0.0
        %428 = vmatpush.msra.mxu0 0.0
        %429 = vmatpush.msra.mxu0 0.0
        %430 = vmatpush.msra.mxu0 %v394
        %431 = vmatpush.msra.mxu0 %v375
        %432 = vmatmul.f32.gmra.mxu0 %v387
        %v433 = vpop.f32.mrf.mxu0
        %v434 = vadd.f32 %v383, %v433
        %435 = vdwg.mxu0
        %v436 = vmax.f32 %v414, 0.0
        %v437 = vmax.f32 %v434, 0.0
        %v438 = vld [vmem:[#allocation3] sm:$0x7]
        %v439 = vld [vmem:[%s4] sm:$0x7]
        %441 = vset.pattern.permute.xlu0 0
        %442 = vperm.xlu0 %441, %v439
        %v443 = vpop.permute.xlu0 %442
        %vm445 = vcmask 39936
        %v447 = vsel %vm445, %v438, 0
        %v450 = vsel %vm389, %v436, 0
        %v453 = vsel %vm389, %v437, 0
        %455 = vmatpush.msra.mxu0 0.0
        %456 = vmatpush.msra.mxu0 0.0
        %457 = vmatpush.msra.mxu0 0.0
        %458 = vmatpush.msra.mxu0 0.0
        %459 = vmatpush.msra.mxu0 0.0
        %460 = vmatpush.msra.mxu0 0.0
        %461 = vmatpush.msra.mxu0 0.0
        %462 = vmatpush.msra.mxu0 0.0
        %463 = vmatpush.msra.mxu0 0.0
        %464 = vmatpush.msra.mxu0 0.0
        %465 = vmatpush.msra.mxu0 0.0
        %466 = vmatpush.msra.mxu0 0.0
        %467 = vmatpush.msra.mxu0 0.0
        %468 = vmatpush.msra.mxu0 0.0
        %469 = vmatpush.msra.mxu0 0.0
        %470 = vmatpush.msra.mxu0 %v450
        %471 = vmatmul.f32.gmra.mxu0 %v447
        %v472 = vpop.f32.mrf.mxu0
        %v473 = vadd.f32 %v443, %v472
        %474 = vdwg.mxu0
        %475 = vmatpush.msra.mxu0 0.0
        %476 = vmatpush.msra.mxu0 0.0
        %477 = vmatpush.msra.mxu0 0.0
        %478 = vmatpush.msra.mxu0 0.0
        %479 = vmatpush.msra.mxu0 0.0
        %480 = vmatpush.msra.mxu0 0.0
        %481 = vmatpush.msra.mxu0 0.0
        %482 = vmatpush.msra.mxu0 0.0
        %483 = vmatpush.msra.mxu0 0.0
        %484 = vmatpush.msra.mxu0 0.0
        %485 = vmatpush.msra.mxu0 0.0
        %486 = vmatpush.msra.mxu0 0.0
        %487 = vmatpush.msra.mxu0 0.0
        %488 = vmatpush.msra.mxu0 0.0
        %489 = vmatpush.msra.mxu0 0.0
        %490 = vmatpush.msra.mxu0 %v453
        %491 = vmatmul.f32.gmra.mxu0 %v447
        %v492 = vpop.f32.mrf.mxu0
        %v493 = vadd.f32 %v443, %v492
        %494 = vdwg.mxu0
        %v495 = vmax.f32 %v473, 0.0
        %v496 = vmax.f32 %v493, 0.0
        %v497 = vld [vmem:[%s5] sm:$0x1f]
        %v498 = vld [vmem:[%s6] sm:$0x1f]
        %500 = vset.pattern.permute.xlu0 0
        %501 = vperm.xlu0 %500, %v498
        %v502 = vpop.permute.xlu0 %501
        %vm504 = vcmask 23552
        %v506 = vsel %vm504, %v497, 0
        %vm508 = vcmask 1042432
        %v510 = vsel %vm508, %v495, 0
        %v513 = vsel %vm508, %v496, 0
        %515 = vmatpush.msra.mxu0 0.0
        %516 = vmatpush.msra.mxu0 0.0
        %517 = vmatpush.msra.mxu0 0.0
        %518 = vmatpush.msra.mxu0 0.0
        %519 = vmatpush.msra.mxu0 0.0
        %520 = vmatpush.msra.mxu0 0.0
        %521 = vmatpush.msra.mxu0 0.0
        %522 = vmatpush.msra.mxu0 0.0
        %523 = vmatpush.msra.mxu0 0.0
        %524 = vmatpush.msra.mxu0 0.0
        %525 = vmatpush.msra.mxu0 0.0
        %526 = vmatpush.msra.mxu0 0.0
        %527 = vmatpush.msra.mxu0 0.0
        %528 = vmatpush.msra.mxu0 0.0
        %529 = vmatpush.msra.mxu0 0.0
        %530 = vmatpush.msra.mxu0 %v510
        %531 = vmatmul.f32.gmra.mxu0 %v506
        %v532 = vpop.f32.mrf.mxu0
        %v533 = vadd.f32 %v502, %v532
        %534 = vdwg.mxu0
        %535 = vmatpush.msra.mxu0 0.0
        %536 = vmatpush.msra.mxu0 0.0
        %537 = vmatpush.msra.mxu0 0.0
        %538 = vmatpush.msra.mxu0 0.0
        %539 = vmatpush.msra.mxu0 0.0
        %540 = vmatpush.msra.mxu0 0.0
        %541 = vmatpush.msra.mxu0 0.0
        %542 = vmatpush.msra.mxu0 0.0
        %543 = vmatpush.msra.mxu0 0.0
        %544 = vmatpush.msra.mxu0 0.0
        %545 = vmatpush.msra.mxu0 0.0
        %546 = vmatpush.msra.mxu0 0.0
        %547 = vmatpush.msra.mxu0 0.0
        %548 = vmatpush.msra.mxu0 0.0
        %549 = vmatpush.msra.mxu0 0.0
        %550 = vmatpush.msra.mxu0 %v513
        %551 = vmatmul.f32.gmra.mxu0 %v506
        %v552 = vpop.f32.mrf.mxu0
        %v553 = vadd.f32 %v502, %v552
        %554 = vdwg.mxu0
        %v555 = vmax.f32 %v533, 0.0
        %v556 = vmax.f32 %v553, 0.0
        %v557 = vld [vmem:[%s7] sm:$0xff]
        %v558 = vld [vmem:[%s7 + $0x8] sm:$0x1f]
        %v559 = vld [vmem:[%s8] sm:$0xff]
        %v560 = vld [vmem:[%s8 + $0x8] sm:$0x1f]
        %562 = vset.pattern.permute.xlu0 0
        %563 = vperm.xlu0 %562, %v559
        %v564 = vpop.permute.xlu0 %563
        %567 = vset.pattern.permute.xlu0 0
        %568 = vperm.xlu0 %567, %v560
        %v569 = vpop.permute.xlu0 %568
        %v572 = vsel %vm445, %v557, 0
        %v575 = vsel %vm445, %v558, 0
        %v578 = vsel %vm389, %v555, 0
        %v581 = vsel %vm389, %v556, 0
        %583 = vmatpush.msra.mxu0 0.0
        %584 = vmatpush.msra.mxu0 0.0
        %585 = vmatpush.msra.mxu0 0.0
        %586 = vmatpush.msra.mxu0 0.0
        %587 = vmatpush.msra.mxu0 0.0
        %588 = vmatpush.msra.mxu0 0.0
        %589 = vmatpush.msra.mxu0 0.0
        %590 = vmatpush.msra.mxu0 0.0
        %591 = vmatpush.msra.mxu0 0.0
        %592 = vmatpush.msra.mxu0 0.0
        %593 = vmatpush.msra.mxu0 0.0
        %594 = vmatpush.msra.mxu0 0.0
        %595 = vmatpush.msra.mxu0 0.0
        %596 = vmatpush.msra.mxu0 0.0
        %597 = vmatpush.msra.mxu0 0.0
        %598 = vmatpush.msra.mxu0 %v578
        %599 = vmatmul.f32.gmra.mxu0 %v572
        %v600 = vpop.f32.mrf.mxu0
        %v601 = vadd.f32 %v564, %v600
        %602 = vmatmul.f32.gmra.mxu0 %v575
        %v603 = vpop.f32.mrf.mxu0
        %v604 = vadd.f32 %v569, %v603
        %605 = vdwg.mxu0
        %606 = vmatpush.msra.mxu0 0.0
        %607 = vmatpush.msra.mxu0 0.0
        %608 = vmatpush.msra.mxu0 0.0
        %609 = vmatpush.msra.mxu0 0.0
        %610 = vmatpush.msra.mxu0 0.0
        %611 = vmatpush.msra.mxu0 0.0
        %612 = vmatpush.msra.mxu0 0.0
        %613 = vmatpush.msra.mxu0 0.0
        %614 = vmatpush.msra.mxu0 0.0
        %615 = vmatpush.msra.mxu0 0.0
        %616 = vmatpush.msra.mxu0 0.0
        %617 = vmatpush.msra.mxu0 0.0
        %618 = vmatpush.msra.mxu0 0.0
        %619 = vmatpush.msra.mxu0 0.0
        %620 = vmatpush.msra.mxu0 0.0
        %621 = vmatpush.msra.mxu0 %v581
        %622 = vmatmul.f32.gmra.mxu0 %v572
        %v623 = vpop.f32.mrf.mxu0
        %v624 = vadd.f32 %v564, %v623
        %625 = vmatmul.f32.gmra.mxu0 %v575
        %v626 = vpop.f32.mrf.mxu0
        %v627 = vadd.f32 %v569, %v626
        %628 = vdwg.mxu0
        %v629 = vmax.f32 %v601, 0.0
        %v630 = vmax.f32 %v624, 0.0
        %v631 = vmax.f32 %v604, 0.0
        %v632 = vmax.f32 %v627, 0.0
        %633 = vst [vmem:[%s371] sm:$0xff] %v629
        %634 = vst [vmem:[%s371 + $0x8] sm:$0xff] %v630
        %635 = vst [vmem:[%s371 + $0x10] sm:$0x1f] %v631
        %636 = vst [vmem:[%s371 + $0x18] sm:$0x1f] %v632
        %s637 = sand.u32 %s226, 1
        %s638 = scalar_lea.sflag [#allocation5], %s637
        %s639 = sand.u32 %s226, 1
        %s640 = smul.addr %s639, 32
        %s641 = scalar_lea.vmem [#allocation6], %s640
        // Predicated region
        $region84: #{autoencoder_forward_t.1} parent=74 // pred_check
          %p642 = pneg %p236
        $region85: #{autoencoder_forward_t.1} parent=74 // pred_check_branch
          %644 = sbr.rel (%p642) target = $region87
        $region86: #{autoencoder_forward_t.1} parent=74 // pred_region
          %s645 = smul.u32 2, %s24
          %647 = vsyncadd %s638, 0
          %s648 = smul.addr %s645, 8
          %s649 = scalar_lea.hbm %s9, %s648
          %s650 = sshll.u32 %s641, 4
          %s651 = int_to_ptr.vmem [resolvable:$true] %s650
          %s652 = sshll.u32 %s649, 4
          %s653 = int_to_ptr.hbm [resolvable:$true] %s652
          %658 = dma.vmem_to_hbm [thread:$0]  %s651, 512, %s653, %s638, 256, 512, 16
        $region87: #{autoencoder_forward_t.1} parent=74 // pred_fallthru
          _
      $region75: #{autoencoder_forward_t.1} parent=5 // pred_fallthru
        _
      %p659 = scmp.le.s32.totalorder 2, %s19
      // Predicated region
      $region88: #{autoencoder_forward_t.1} parent=5 // pred_check
        %p660 = pneg %p659
      $region89: #{autoencoder_forward_t.1} parent=5 // pred_check_branch
        %662 = sbr.rel (%p660) target = $region91
      $region90: #{autoencoder_forward_t.1} parent=5 // pred_region
        %s663 = ssub.s32 %s19, 2
        // Predicated region
        $region92: #{autoencoder_forward_t.1} parent=90 // pred_check
          %p664 = pneg %p242
        $region93: #{autoencoder_forward_t.1} parent=90 // pred_check_branch
          %666 = sbr.rel (%p664) target = $region95
        $region94: #{autoencoder_forward_t.1} parent=90 // pred_region
          %s667 = sand.u32 %s227, 1
          %s668 = scalar_lea.sflag [#allocation5], %s667
          %s669 = sand.u32 %s227, 1
          %s670 = smul.addr %s669, 32
          %s671 = scalar_lea.vmem [#allocation6], %s670
          %673 = dma.done %s668, 512
        $region95: #{autoencoder_forward_t.1} parent=90 // pred_fallthru
          _
      $region91: #{autoencoder_forward_t.1} parent=5 // pred_fallthru
        _
    $region6: #{autoencoder_forward_t.1} parent=1 // loop_footer
      %s23 = sadd.s32 1, %s19
    $region7: #{autoencoder_forward_t.1} parent=1 // loop_footer_branch
      %18 = sbr.rel target = $region3
    $region8: #{autoencoder_forward_t.1} parent=1 // loop_exit
      _
    %674 = vsyncpa [#allocation4], 1
    %s675 = scalar_lea.sflag [#allocation4], 1
    %676 = vsyncpa %s675, 1
    %677 = vsyncpa [#allocation5], 1
    %s678 = scalar_lea.sflag [#allocation5], 1
    %679 = vsyncpa %s678, 1

</llo_original>
